<compile_context>
chip_gen: v5e
topology: v5e:2x2
jax: 0.10.0
libtpu: 0.0.40
codegen_flags: <defaults>
</compile_context>

<pallas_src>
import math

import jax
import jax.numpy as jnp
from jax.experimental import pallas as pl
from jax.experimental.pallas import tpu as pltpu


# ----------------------------------------------------------------------------
# Module constants (mirror Nerve defaults)
# ----------------------------------------------------------------------------
MIN_FIBER_D = 0.1
MAX_FIBER_D = 30.0

_LANE = 128
_MAX_TILE_ROWS = 4096   # 2 MiB f32 per block; 2x(in+out) buffers ~8 MiB (v7x-safe)


def get_threshold(diameter: float, pulse_duration_ms: float) -> float:
    """Scalar threshold current (matches Nerve.get_threshold, pure python)."""
    i_d = (-0.00805161 * diameter
           - 3.84887702 / math.sqrt(diameter)
           + 7.74579978 / diameter
           + 0.8655029)
    scale = i_d / 0.226
    return (0.00951643 / pulse_duration_ms + 0.12270154) * scale


def _round_up(x: int, m: int) -> int:
    return ((x + m - 1) // m) * m


# ----------------------------------------------------------------------------
# Pallas kernel: elementwise nerve activation probability
# ----------------------------------------------------------------------------
def _nerve_kernel(params_ref, v_ref, o_ref):
    """params (SMEM, f32[5]) = [v_to_ma, i_min, i_max, c1, c0] with
    c1 = 1/(sqrt(2)*diameter_std), c0 = -diameter_mean*c1."""
    v_to_ma = params_ref[0]
    i_min = params_ref[1]
    i_max = params_ref[2]
    c1 = params_ref[3]
    c0 = params_ref[4]

    v = v_ref[...].astype(jnp.float32)
    i = jnp.clip(v * v_to_ma, i_min, i_max)

    # Exact reciprocal keeps us within 1e-5 of the reference.
    # TODO(synk): on v7x, pl.reciprocal(i, approx=True) moves this to the EUP
    # slot but loosens precision beyond the 1e-5 check used below.
    inv_i = 1.0 / i

    # Horner form of: -1.47858995*i - 1.33870859/i + 1.09223674/i^2 + 5.30642146
    poly = (5.30642146 - 1.47858995 * i
            + inv_i * (-1.33870859 + 1.09223674 * inv_i))
    d = jnp.maximum(poly, 0.0)

    # 1 - NormalCDF(d; mean, std) = 0.5 - 0.5*erf((d - mean) / (std*sqrt(2)))
    z = d * c1 + c0
    o_ref[...] = (0.5 - 0.5 * jax.lax.erf(z)).astype(o_ref.dtype)


# ----------------------------------------------------------------------------
# Wrapper
# ----------------------------------------------------------------------------
class NervePallas:
    def __init__(self, diameter_mean=11.0, diameter_std=4.0, rho=300.0,
                 spontaneous_rate_hz=1.0):
        self.diameter_mean = float(diameter_mean)
        self.diameter_std = float(diameter_std)
        self.rho = float(rho)
        self.spontaneous_rate_hz = float(spontaneous_rate_hz)  # unused in forward
        self.v_to_ma = 400.0 * math.pi / rho

    def _params(self, pulse_duration_ms: float):
        i_max = get_threshold(MIN_FIBER_D, pulse_duration_ms)
        i_min = get_threshold(MAX_FIBER_D, pulse_duration_ms)
        c1 = 1.0 / (math.sqrt(2.0) * self.diameter_std)
        c0 = -self.diameter_mean * c1
        return jnp.array([self.v_to_ma, i_min, i_max, c1, c0], dtype=jnp.float32)

    def __call__(self, v, pulse_duration_ms: float = 0.1):
        v = jnp.asarray(v)
        orig_shape = v.shape
        in_dtype = v.dtype
        # torch promotes to float; guard integer inputs so probabilities don't truncate.
        out_dtype = in_dtype if jnp.issubdtype(in_dtype, jnp.floating) else jnp.float32

        flat = v.reshape(-1)
        n = flat.shape[0]

        # Lane-dense [rows, 128] slab. Only pad when n isn't a multiple of 128
        # (required for the reshape).
        padded_n = _round_up(n, _LANE)
        if padded_n != n:
            # TODO(synk): a masked tail block would avoid this full-tensor copy.
            flat = jnp.pad(flat, (0, padded_n - n))
        rows = padded_n // _LANE

        # Tile selection: as big as possible (up to 2 MiB f32 blocks) while
        # giving >=~8 grid steps on large inputs (feeds both v7x TensorCores).
        if rows <= _MAX_TILE_ROWS:
            tile_rows = rows                          # single full block
        else:
            tile_rows = min(_MAX_TILE_ROWS,
                            max(512, _round_up(pl.cdiv(rows, 8), 16)))
        grid = (pl.cdiv(rows, tile_rows),)            # partial last block is masked

        x2d = flat.reshape(rows, _LANE)
        params = self._params(pulse_duration_ms)

        out2d = pl.pallas_call(
            _nerve_kernel,
            out_shape=jax.ShapeDtypeStruct((rows, _LANE), out_dtype),
            grid_spec=pltpu.PrefetchScalarGridSpec(
                num_scalar_prefetch=1,                # params -> SMEM
                grid=grid,
                in_specs=[pl.BlockSpec((tile_rows, _LANE),
                                       lambda r, p: (r, 0))],
                out_specs=pl.BlockSpec((tile_rows, _LANE),
                                       lambda r, p: (r, 0)),
            ),
            compiler_params=pltpu.CompilerParams(
                dimension_semantics=("parallel",)),
        )(params, x2d)

        if padded_n != n:
            out = out2d.reshape(-1)[:n].reshape(orig_shape)
        else:
            out = out2d.reshape(orig_shape)
        return out


# ----------------------------------------------------------------------------
# Pure-JAX reference for correctness check
# ----------------------------------------------------------------------------
def nerve_ref(v, *, diameter_mean=11.0, diameter_std=4.0, rho=300.0,
              pulse_duration_ms=0.1):
    v_to_ma = 400.0 * math.pi / rho
    i_max = get_threshold(MIN_FIBER_D, pulse_duration_ms)
    i_min = get_threshold(MAX_FIBER_D, pulse_duration_ms)
    i = jnp.clip(v * v_to_ma, i_min, i_max)
    out = -1.47858995 * i - 1.33870859 / i + 1.09223674 / (i * i) + 5.30642146
    d = jax.nn.relu(out)
    z = (d - diameter_mean) / (diameter_std * math.sqrt(2.0))
    cdf = 0.5 * (1.0 + jax.lax.erf(z))
    return 1.0 - cdf


# ----------------------------------------------------------------------------
if __name__ == "__main__":
    key = jax.random.PRNGKey(0)
    # NCHW-style input: stimulation potentials in volts
    x = jax.random.uniform(key, (2, 4, 16, 16), dtype=jnp.float32,
                           minval=0.0, maxval=2.0)

    nerve = NervePallas(diameter_mean=11.0, diameter_std=4.0, rho=300.0)
    y = nerve(x, pulse_duration_ms=0.1)
    y = jax.block_until_ready(y)

    y_ref = nerve_ref(x, pulse_duration_ms=0.1)
    assert y.shape == x.shape
    assert y.dtype == x.dtype
    assert jnp.allclose(y, y_ref, atol=1e-5, rtol=1e-5), "mismatch vs reference"

    print("KERNEL_OK")
</pallas_src>

<mosaic_0001>
module attributes {stable_mosaic.version = 11 : i64} {
  func.func @_nerve_kernel(%arg0: i32, %arg1: memref<5xf32, #tpu.memory_space<smem>>, %arg2: memref<16x128xf32, #tpu.memory_space<vmem>>, %arg3: memref<16x128xf32, #tpu.memory_space<vmem>>) attributes {dimension_semantics = [#tpu.dimension_semantics<parallel>], iteration_bounds = array<i64: 1>, scalar_prefetch = 1 : i64, scratch_operands = 0 : i64, tpu.core_type = #tpu.core_type<tc>, window_params = [{transform_indices = @transform_0, window_bounds = array<i64: 16, 128>}, {transform_indices = @transform_1, window_bounds = array<i64: 16, 128>}]} {
    %c0 = arith.constant 0 : index
    %0 = memref.load %arg1[%c0] : memref<5xf32, #tpu.memory_space<smem>>
    %c1 = arith.constant 1 : index
    %1 = memref.load %arg1[%c1] : memref<5xf32, #tpu.memory_space<smem>>
    %c2 = arith.constant 2 : index
    %2 = memref.load %arg1[%c2] : memref<5xf32, #tpu.memory_space<smem>>
    %c3 = arith.constant 3 : index
    %3 = memref.load %arg1[%c3] : memref<5xf32, #tpu.memory_space<smem>>
    %c4 = arith.constant 4 : index
    %4 = memref.load %arg1[%c4] : memref<5xf32, #tpu.memory_space<smem>>
    %c0_0 = arith.constant 0 : index
    %c0_1 = arith.constant 0 : index
    %5 = vector.load %arg2[%c0_0, %c0_1] : memref<16x128xf32, #tpu.memory_space<vmem>>, vector<16x128xf32>
    %6 = vector.broadcast %0 : f32 to vector<16x128xf32>
    %7 = arith.mulf %5, %6 : vector<16x128xf32>
    %8 = vector.broadcast %1 : f32 to vector<16x128xf32>
    %9 = arith.maximumf %8, %7 : vector<16x128xf32>
    %10 = vector.broadcast %2 : f32 to vector<16x128xf32>
    %11 = arith.minimumf %10, %9 : vector<16x128xf32>
    %cst = arith.constant 1.000000e+00 : f32
    %12 = vector.broadcast %cst : f32 to vector<16x128xf32>
    %13 = arith.divf %12, %11 : vector<16x128xf32>
    %cst_2 = arith.constant 1.47858989 : f32
    %14 = vector.broadcast %cst_2 : f32 to vector<16x128xf32>
    %15 = arith.mulf %14, %11 : vector<16x128xf32>
    %cst_3 = arith.constant 5.30642128 : f32
    %16 = vector.broadcast %cst_3 : f32 to vector<16x128xf32>
    %17 = arith.subf %16, %15 : vector<16x128xf32>
    %cst_4 = arith.constant 1.09223676 : f32
    %18 = vector.broadcast %cst_4 : f32 to vector<16x128xf32>
    %19 = arith.mulf %18, %13 : vector<16x128xf32>
    %cst_5 = arith.constant -1.33870864 : f32
    %20 = vector.broadcast %cst_5 : f32 to vector<16x128xf32>
    %21 = arith.addf %20, %19 : vector<16x128xf32>
    %22 = arith.mulf %13, %21 : vector<16x128xf32>
    %23 = arith.addf %17, %22 : vector<16x128xf32>
    %cst_6 = arith.constant 0.000000e+00 : f32
    %24 = vector.broadcast %cst_6 : f32 to vector<16x128xf32>
    %25 = arith.maximumf %23, %24 : vector<16x128xf32>
    %26 = vector.broadcast %3 : f32 to vector<16x128xf32>
    %27 = arith.mulf %25, %26 : vector<16x128xf32>
    %28 = vector.broadcast %4 : f32 to vector<16x128xf32>
    %29 = arith.addf %27, %28 : vector<16x128xf32>
    %30 = math.erf %29 : vector<16x128xf32>
    %cst_7 = arith.constant 5.000000e-01 : f32
    %31 = vector.broadcast %cst_7 : f32 to vector<16x128xf32>
    %32 = arith.mulf %31, %30 : vector<16x128xf32>
    %cst_8 = arith.constant 5.000000e-01 : f32
    %33 = vector.broadcast %cst_8 : f32 to vector<16x128xf32>
    %34 = arith.subf %33, %32 : vector<16x128xf32>
    %c0_9 = arith.constant 0 : index
    %c0_10 = arith.constant 0 : index
    %35 = vector.load %arg3[%c0_9, %c0_10] : memref<16x128xf32, #tpu.memory_space<vmem>>, vector<16x128xf32>
    tpu.vector_store %arg3[%c0_9, %c0_10], %34 {strides = array<i32>} : memref<16x128xf32, #tpu.memory_space<vmem>>, vector<16x128xf32>,
    return
  }
  func.func @transform_0(%arg0: i32, %arg1: memref<5xf32, #tpu.memory_space<smem>>) -> (i32, i32) {
    %c0_i32 = arith.constant 0 : i32
    %c0_i32_0 = arith.constant 0 : i32
    return %arg0, %c0_i32 : i32, i32
  }
  func.func @transform_1(%arg0: i32, %arg1: memref<5xf32, #tpu.memory_space<smem>>) -> (i32, i32) {
    %c0_i32 = arith.constant 0 : i32
    %c0_i32_0 = arith.constant 0 : i32
    return %arg0, %c0_i32 : i32, i32
  }
}

</mosaic_0001>

<llo_original>
// kernel: tpu_custom_call.1
$region0: #{tpu_custom_call.1}
  #allocation0 [shape = 'u32[]', space=smem, size = 0x4, offset = 0x4, fixed_abs, tag = 'smem constant byte address 0x4 - core index']
  #allocation1 [shape = 'u32[72,128]{1,0:T(1,128)}', space=vmem, size = 0x9000, scoped, tag = 'internal scratch']
  #allocation2 [shape = 's32[1]{0}', space=sflag, size = 0x4, scoped, tag = 'scoped memory for tpu_custom_call.1']
  #allocation3 [shape = 'u8[512]{0}', space=smem, size = 0x200, scoped, tag = 'prefetched SMEM operand 0']
  %s0 = inlined_call_operand.hbm [shape: f32[5], index: 0, kind: input, shape index: {}]
  %s1 = inlined_call_operand.hbm [shape: f32[16,128], index: 1, kind: input, shape index: {}]
  %s2 = inlined_call_operand.hbm [shape: f32[16,128], index: 2, kind: output, shape index: {}]
  %s3 = sld [smem:[#allocation0]]
  $region18: #{tpu_custom_call.1} parent=0
    _
  %s5 = ssub.s32 1, %s3
  %s6 = scalar_select 0, %s5, %s3
  %s8 = sshll.u32 %s0, 4
  %s9 = int_to_ptr.hbm [resolvable:$true] %s8
  %11 = dma.hbm_to_smem %s9, 16, [#allocation3], [#allocation2]
  %13 = dma.done [#allocation2], 16
  %14 = sfence
  $region1: #{tpu_custom_call.1} parent=0
    #allocation4 [shape = 'u8[8192]{0}', space=vmem, size = 0x2000, scoped, tag = 'input window, operand 1, single buffered']
    #allocation5 [shape = 's32[1]{0}', space=sflag, size = 0x4, scoped, tag = 'scoped memory for tpu_custom_call.1']
    #allocation6 [shape = 's32[1]{0}', space=sflag, size = 0x4, scoped, tag = 'scoped memory for tpu_custom_call.1']
    #allocation7 [shape = 'u8[8192]{0}', space=vmem, size = 0x2000, scoped, tag = 'output window, operand 0, single buffered']
    %15 = vsyncpa [#allocation5], 0
    %16 = vsyncpa [#allocation6], 0
    // Predicated region
    $region2: #{tpu_custom_call.1} parent=1 // pred_check
      _
    $region3: #{tpu_custom_call.1} parent=1 // pred_check_branch
      %18 = sbr.rel (0) target = $region5
    $region4: #{tpu_custom_call.1} parent=1 // pred_region
      %20 = vsyncadd [#allocation5], 0
      %s21 = sshll.u32 %s1, 4
      %s22 = int_to_ptr.hbm [resolvable:$true] %s21
      %s23 = sshll.u32 [#allocation4], 4
      %s24 = int_to_ptr.vmem [resolvable:$true] %s23
      %29 = dma.hbm_to_vmem [thread:$0]  %s22, 256, %s24, [#allocation5], 128, 128, 8
    $region5: #{tpu_custom_call.1} parent=1 // pred_fallthru
      _
    // Predicated region
    $region6: #{tpu_custom_call.1} parent=1 // pred_check
      _
    $region7: #{tpu_custom_call.1} parent=1 // pred_check_branch
      %31 = sbr.rel (0) target = $region9
    $region8: #{tpu_custom_call.1} parent=1 // pred_region
      %33 = dma.done [#allocation5], 256
    $region9: #{tpu_custom_call.1} parent=1 // pred_fallthru
      _
    %s34 = sld [smem:[#allocation3]]
    %s35 = sld [smem:[#allocation3 + $0x1]]
    %s36 = sld [smem:[#allocation3 + $0x2]]
    %s37 = sld [smem:[#allocation3 + $0x3]]
    %s38 = sld [smem:[#allocation3 + $0x4]]
    %v39 = vld [vmem:[#allocation4] sm:$0xff]
    %v40 = vld [vmem:[#allocation4 + $0x8] sm:$0xff]
    %v41 = vstv %s34
    %v42 = vmul.f32 %v39, %v41
    %v43 = vmul.f32 %v40, %v41
    %v44 = vstv %s35
    %v45 = vmax.f32 %v44, %v42
    %v46 = vmax.f32 %v44, %v43
    %v47 = vstv %s36
    %v48 = vmin.f32 %v47, %v45
    %v49 = vmin.f32 %v47, %v46
    %v50 = vrcp.pop %v48
    %v51 = vmul.f32 %v48, %v50
    %v52 = vsub.f32 1.0, %v51
    %v53 = vmul.f32 %v50, %v52
    %v54 = vadd.f32 %v50, %v53
    %vm55 = vweird.f32 %v48
    %vm56 = vweird.f32 %v50
    %vm57 = vmor %vm55, %vm56
    %v58 = vsel %vm57, %v50, %v54
    %v59 = vand.u32 2147483647, %v48
    %vm60 = vcmp.eq.f32.partialorder %v59, 8.507059e+37
    %v61 = vand.u32 %v48, 2147483648
    %v62 = vor.u32 1.1754944e-38, %v61
    %v63 = vsel %vm60, %v62, %v58
    %v64 = vmul.f32 1.0, %v63
    %v65 = vrcp.pop %v49
    %v66 = vmul.f32 %v49, %v65
    %v67 = vsub.f32 1.0, %v66
    %v68 = vmul.f32 %v65, %v67
    %v69 = vadd.f32 %v65, %v68
    %vm70 = vweird.f32 %v49
    %vm71 = vweird.f32 %v65
    %vm72 = vmor %vm70, %vm71
    %v73 = vsel %vm72, %v65, %v69
    %v74 = vand.u32 2147483647, %v49
    %vm75 = vcmp.eq.f32.partialorder %v74, 8.507059e+37
    %v76 = vand.u32 %v49, 2147483648
    %v77 = vor.u32 1.1754944e-38, %v76
    %v78 = vsel %vm75, %v77, %v73
    %v79 = vmul.f32 1.0, %v78
    %v80 = vmul.f32 %v48, 1.4785899
    %v81 = vmul.f32 %v49, 1.4785899
    %v82 = vsub.f32 5.3064213, %v80
    %v83 = vsub.f32 5.3064213, %v81
    %v84 = vmul.f32 %v64, 1.0922368
    %v85 = vmul.f32 %v79, 1.0922368
    %v86 = vadd.f32 %v84, -1.3387086
    %v87 = vadd.f32 %v85, -1.3387086
    %v88 = vmul.f32 %v64, %v86
    %v89 = vmul.f32 %v79, %v87
    %v90 = vadd.f32 %v82, %v88
    %v91 = vadd.f32 %v83, %v89
    %v92 = vmax.f32 %v90, 0.0
    %v93 = vmax.f32 %v91, 0.0
    %v94 = vstv %s37
    %v95 = vmul.f32 %v92, %v94
    %v96 = vmul.f32 %v93, %v94
    %v97 = vstv %s38
    %v98 = vadd.f32 %v95, %v97
    %v99 = vadd.f32 %v96, %v97
    %v100 = vmul.f32 %v98, %v98
    %v101 = vmin.f32 16.0, %v100
    %v102 = vmul.f32 %v101, 2.1237322e-06
    %v103 = vadd.f32 %v102, 0.00028619796
    %v104 = vmul.f32 %v101, %v103
    %v105 = vadd.f32 %v104, 0.0036580483
    %v106 = vmul.f32 %v101, %v105
    %v107 = vadd.f32 %v106, 0.05243302
    %v108 = vmul.f32 %v101, %v107
    %v109 = vadd.f32 %v108, 0.18741608
    %v110 = vmul.f32 %v101, %v109
    %v111 = vadd.f32 %v110, 1.1283791
    %v112 = vmul.f32 %v98, %v111
    %v113 = vmul.f32 %v101, 3.8918573e-05
    %v114 = vadd.f32 %v113, 0.001143296
    %v115 = vmul.f32 %v101, %v114
    %v116 = vadd.f32 %v115, 0.014752088
    %v117 = vmul.f32 %v101, %v116
    %v118 = vadd.f32 %v117, 0.112945676
    %v119 = vmul.f32 %v101, %v118
    %v120 = vadd.f32 %v119, 0.4994258
    %v121 = vmul.f32 %v101, %v120
    %v122 = vadd.f32 %v121, 1.0
    %v123 = vrcp.pop %v122
    %v124 = vmul.f32 %v122, %v123
    %v125 = vsub.f32 1.0, %v124
    %v126 = vmul.f32 %v123, %v125
    %v127 = vadd.f32 %v123, %v126
    %vm128 = vweird.f32 %v122
    %vm129 = vweird.f32 %v123
    %vm130 = vmor %vm128, %vm129
    %v131 = vsel %vm130, %v123, %v127
    %v132 = vand.u32 2147483647, %v122
    %vm133 = vcmp.eq.f32.partialorder %v132, 8.507059e+37
    %v134 = vand.u32 %v122, 2147483648
    %v135 = vor.u32 1.1754944e-38, %v134
    %v136 = vsel %vm133, %v135, %v131
    %v137 = vmul.f32 %v112, %v136
    %v138 = vmin.f32 %v137, 1.0
    %v139 = vmax.f32 %v138, -1.0
    %v140 = vmul.f32 %v99, %v99
    %v141 = vmin.f32 16.0, %v140
    %v142 = vmul.f32 %v141, 2.1237322e-06
    %v143 = vadd.f32 %v142, 0.00028619796
    %v144 = vmul.f32 %v141, %v143
    %v145 = vadd.f32 %v144, 0.0036580483
    %v146 = vmul.f32 %v141, %v145
    %v147 = vadd.f32 %v146, 0.05243302
    %v148 = vmul.f32 %v141, %v147
    %v149 = vadd.f32 %v148, 0.18741608
    %v150 = vmul.f32 %v141, %v149
    %v151 = vadd.f32 %v150, 1.1283791
    %v152 = vmul.f32 %v99, %v151
    %v153 = vmul.f32 %v141, 3.8918573e-05
    %v154 = vadd.f32 %v153, 0.001143296
    %v155 = vmul.f32 %v141, %v154
    %v156 = vadd.f32 %v155, 0.014752088
    %v157 = vmul.f32 %v141, %v156
    %v158 = vadd.f32 %v157, 0.112945676
    %v159 = vmul.f32 %v141, %v158
    %v160 = vadd.f32 %v159, 0.4994258
    %v161 = vmul.f32 %v141, %v160
    %v162 = vadd.f32 %v161, 1.0
    %v163 = vrcp.pop %v162
    %v164 = vmul.f32 %v162, %v163
    %v165 = vsub.f32 1.0, %v164
    %v166 = vmul.f32 %v163, %v165
    %v167 = vadd.f32 %v163, %v166
    %vm168 = vweird.f32 %v162
    %vm169 = vweird.f32 %v163
    %vm170 = vmor %vm168, %vm169
    %v171 = vsel %vm170, %v163, %v167
    %v172 = vand.u32 2147483647, %v162
    %vm173 = vcmp.eq.f32.partialorder %v172, 8.507059e+37
    %v174 = vand.u32 %v162, 2147483648
    %v175 = vor.u32 1.1754944e-38, %v174
    %v176 = vsel %vm173, %v175, %v171
    %v177 = vmul.f32 %v152, %v176
    %v178 = vmin.f32 %v177, 1.0
    %v179 = vmax.f32 %v178, -1.0
    %v180 = vmul.f32 %v139, 0.5
    %v181 = vmul.f32 %v179, 0.5
    %v182 = vsub.f32 0.5, %v180
    %v183 = vsub.f32 0.5, %v181
    %184 = vst [vmem:[#allocation7] sm:$0xff] %v182
    %185 = vst [vmem:[#allocation7 + $0x8] sm:$0xff] %v183
    // Predicated region
    $region10: #{tpu_custom_call.1} parent=1 // pred_check
      _
    $region11: #{tpu_custom_call.1} parent=1 // pred_check_branch
      %187 = sbr.rel (0) target = $region13
    $region12: #{tpu_custom_call.1} parent=1 // pred_region
      %189 = vsyncadd [#allocation6], 0
      %s190 = sshll.u32 [#allocation7], 4
      %s191 = int_to_ptr.vmem [resolvable:$true] %s190
      %s192 = sshll.u32 %s2, 4
      %s193 = int_to_ptr.hbm [resolvable:$true] %s192
      %198 = dma.vmem_to_hbm [thread:$0]  %s191, 256, %s193, [#allocation6], 128, 128, 8
    $region13: #{tpu_custom_call.1} parent=1 // pred_fallthru
      _
    // Predicated region
    $region14: #{tpu_custom_call.1} parent=1 // pred_check
      _
    $region15: #{tpu_custom_call.1} parent=1 // pred_check_branch
      %200 = sbr.rel (0) target = $region17
    $region16: #{tpu_custom_call.1} parent=1 // pred_region
      %202 = dma.done [#allocation6], 256
    $region17: #{tpu_custom_call.1} parent=1 // pred_fallthru
      _
    %203 = vsyncpa [#allocation5], 1
    %204 = vsyncpa [#allocation6], 1

</llo_original>
